<compile_context>
chip_gen: v5e
topology: v5e:2x2
jax: 0.10.0
libtpu: 0.0.40
codegen_flags: <defaults>
</compile_context>

<pallas_src>
import math

import jax
import jax.numpy as jnp
from jax import lax
from jax.experimental import pallas as pl
from jax.experimental.pallas import tpu as pltpu


def _round_up(v: int, m: int) -> int:
    return (v + m - 1) // m * m


def _mish(x):
    # Mish(x) = x * tanh(softplus(x)) = x * n / (n + 2), n = e^x * (e^x + 2).
    # One EUP exp (plus VPU mul/add and an exact reciprocal) instead of the
    # three transcendentals in softplus+tanh.  Clamp + where guard overflow:
    # for x > 20, tanh(softplus(x)) == 1 to f32 precision, so mish(x) == x.
    e = jnp.exp(jnp.minimum(x, 20.0))
    n = e * (e + 2.0)
    return jnp.where(x > 20.0, x, x * n / (n + 2.0))


def _adaptive_pool_matrix(in_len: int, out_len: int, out_pad=None) -> jnp.ndarray:
    """P[t, s] s.t. (P @ x)[t] == adaptive_avg_pool1d(x, out_len)[t].

    Rows t >= out_len (up to out_pad) are zero: they only produce padded
    output rows that the wrapper slices away."""
    out_pad = out_len if out_pad is None else out_pad
    rows = []
    for i in range(out_pad):
        row = [0.0] * in_len
        if i < out_len:
            start = (i * in_len) // out_len
            end = math.ceil((i + 1) * in_len / out_len)
            w = 1.0 / (end - start)
            for s in range(start, end):
                row[s] = w
        rows.append(row)
    return jnp.asarray(rows, dtype=jnp.float32)


def _adaptive_projection_kernel(p_ref, x_ref, w1_ref, b1_ref, w2_ref, b2_ref,
                                o_ref, pooled_ref):
    """One grid step: Bb batch rows -> pooled slab [Bb*Tp, Dp] -> 2 Linears."""
    Bb = x_ref.shape[0]
    Tp = p_ref.shape[0]
    cdt = w1_ref.dtype                       # bf16 compute dtype for MXU inputs

    p = p_ref[...]                           # [Tp, S] bf16 (hoisted out of loop)

    def pool_one(b, carry):
        # x arrives as f32 from HBM; cast to bf16 only here, at the first
        # MXU operand.  Scratch-slab write bounds live ranges per iteration.
        row0 = pl.multiple_of(b * Tp, Tp)    # Tp is a multiple of 8 -> aligned
        pooled_ref[pl.ds(row0, Tp), :] = jnp.dot(
            p, x_ref[b].astype(cdt), preferred_element_type=jnp.float32)
        return carry

    lax.fori_loop(0, Bb, pool_one, 0, unroll=(Bb <= 8))

    pooled = pooled_ref[...]                 # [Bb*Tp, Dp] f32
    h = jnp.dot(pooled.astype(cdt), w1_ref[...],
                preferred_element_type=jnp.float32) + b1_ref[...]   # [Bb*Tp, Hp]
    a = _mish(h)
    out = jnp.dot(a.astype(cdt), w2_ref[...],
                  preferred_element_type=jnp.float32) + b2_ref[...]  # [Bb*Tp, Dp]
    # Single lane/sublane-dense store (Bb*Tp is a multiple of 8, Dp of 128).
    o_ref[...] = out.astype(o_ref.dtype)


def adaptive_projection(x, w1, b1, w2, b2, tgt_seqlen, *, block_batch=None,
                        compute_dtype=jnp.bfloat16):
    """x: [B, S, D] float32 -> [B, T, D] float32 (T = tgt_seqlen)."""
    B, S, D = x.shape
    T = int(tgt_seqlen)
    H = w1.shape[1]                          # 2*D

    LANE, SUB = 128, 8
    Dp = _round_up(D, LANE)
    Hp = _round_up(H, LANE)
    Tp = _round_up(T, SUB)

    # ---- VMEM-budget-aware batch-block size -------------------------------
    vmem_cap = 64 * 1024 * 1024              # conservative fallback (v7x-sized)
    try:
        vmem_cap = int(pltpu.get_tpu_info().vmem_capacity_bytes)
    except Exception:
        pass
    budget = int(vmem_cap * 0.7)             # leave headroom for compiler temps

    x_bytes = jnp.dtype(x.dtype).itemsize

    def step_vmem(bb):
        xb = bb * S * Dp * x_bytes           # x block (double-buffered)
        ob = bb * Tp * Dp * 4                # out block (double-buffered)
        sc = bb * Tp * Dp * 4                # pooled scratch (single)
        wb = (Dp * Hp + Hp * Dp + Tp * S) * 2 + (Hp + Dp) * 4   # weights/biases
        return 2 * (xb + ob) + sc + wb

    if block_batch is None:
        # Target >= 512 flattened MXU rows per step (256-wide MXU on v6e/v7x;
        # v5e's 128-wide MXU is already saturated by smaller multiples — the
        # VMEM clamp below handles constrained configs either way).
        bb = max(1, min(B, pl.cdiv(512, Tp)))
        while bb > 1 and step_vmem(bb) > budget:
            bb = max(1, bb // 2)
        # Keep >= 2 grid steps when B > 1 so both v7x TensorCores get work.
        if B > 1 and bb >= B:
            bb = pl.cdiv(B, 2)
        block_batch = bb
    Bb = int(block_batch)
    Bp = _round_up(B, Bb)                    # prefer Bb | B to avoid padded rows

    cdt = compute_dtype

    # Pad only what is needed.  x stays in its original dtype (f32) — no
    # wrapper-side cast pass; the kernel casts to bf16 at the first matmul.
    if (Bp, Dp) == (B, D):
        x_p = x                              # fast path: no extra HBM pass
    else:
        x_p = jnp.pad(x, ((0, Bp - B), (0, 0), (0, Dp - D)))

    # Zero padding: padded D/H columns/rows stay zero through both Linears and
    # mish(0) = 0, so results in the original [:D] slice are unchanged.
    w1_p = jnp.pad(w1.astype(cdt), ((0, Dp - D), (0, Hp - H)))
    b1_p = jnp.pad(b1.reshape(1, H).astype(jnp.float32), ((0, 0), (0, Hp - H)))
    w2_p = jnp.pad(w2.astype(cdt), ((0, Hp - H), (0, Dp - D)))
    b2_p = jnp.pad(b2.reshape(1, D).astype(jnp.float32), ((0, 0), (0, Dp - D)))
    pool_mat = _adaptive_pool_matrix(S, T, Tp).astype(cdt)       # [Tp, S]

    vmem_limit = min(int(vmem_cap * 0.9),
                     max(32 * 1024 * 1024, int(step_vmem(Bb) * 1.3)))

    def call(const_kwargs):
        in_specs = [
            pl.BlockSpec((Tp, S), lambda b: (0, 0), **const_kwargs),       # P
            pl.BlockSpec((Bb, S, Dp), lambda b: (b, 0, 0)),                # x
            pl.BlockSpec((Dp, Hp), lambda b: (0, 0), **const_kwargs),      # W1
            pl.BlockSpec((1, Hp), lambda b: (0, 0), **const_kwargs),       # b1
            pl.BlockSpec((Hp, Dp), lambda b: (0, 0), **const_kwargs),      # W2
            pl.BlockSpec((1, Dp), lambda b: (0, 0), **const_kwargs),       # b2
        ]
        out_spec = pl.BlockSpec((Bb * Tp, Dp), lambda b: (b, 0))
        return pl.pallas_call(
            _adaptive_projection_kernel,
            out_shape=jax.ShapeDtypeStruct((Bp * Tp, Dp), jnp.float32),
            grid_spec=pltpu.PrefetchScalarGridSpec(
                num_scalar_prefetch=0,
                grid=(Bp // Bb,),
                in_specs=in_specs,
                out_specs=out_spec,
                scratch_shapes=[pltpu.VMEM((Bb * Tp, Dp), jnp.float32)],
            ),
            compiler_params=pltpu.CompilerParams(
                dimension_semantics=("parallel",),
                vmem_limit_bytes=vmem_limit,
            ),
        )(pool_mat, x_p, w1_p, b1_p, w2_p, b2_p)

    try:
        # Grid-invariant operands: single-buffer (saves VMEM, esp. on v7x).
        out = call({"pipeline_mode": pl.Buffered(1)})
    except Exception:
        # Fallback if this jax build rejects pipeline_mode on pallas_call specs.
        out = call({})

    return out.reshape(Bp, Tp, Dp)[:B, :T, :D]


def adaptive_projection_ref(x, w1, b1, w2, b2, tgt_seqlen, compute_dtype=None):
    """Pure-JAX reference.  If compute_dtype is set, mimic the kernel's mixed
    precision (round every matmul input to that dtype, accumulate in f32)."""
    f32 = jnp.float32

    def cast(a):
        return (a.astype(compute_dtype).astype(f32)
                if compute_dtype is not None else a.astype(f32))

    B, S, D = x.shape
    T = int(tgt_seqlen)
    P = _adaptive_pool_matrix(S, T)                               # [T, S]
    pooled = jnp.einsum("ts,bsd->btd", cast(P), cast(x))
    h = jnp.einsum("btd,dh->bth", cast(pooled), cast(w1)) + b1.reshape(1, 1, -1).astype(f32)
    a = h * jnp.tanh(jax.nn.softplus(h))                          # exact Mish
    return (jnp.einsum("bth,hd->btd", cast(a), cast(w2))
            + b2.reshape(1, 1, -1).astype(f32))


def _make_params(key, D):
    H = 2 * D
    kw1, kb1, kw2, kb2 = jax.random.split(key, 4)
    bound1 = 1.0 / math.sqrt(D)
    w1 = jax.random.uniform(kw1, (D, H), jnp.float32, -bound1, bound1)
    b1 = jax.random.uniform(kb1, (1, H), jnp.float32, -bound1, bound1)
    bound2 = 1.0 / math.sqrt(H)
    w2 = jax.random.uniform(kw2, (H, D), jnp.float32, -bound2, bound2)
    b2 = jax.random.uniform(kb2, (1, D), jnp.float32, -bound2, bound2)
    return w1, b1, w2, b2


def _check(x, w1, b1, w2, b2, T, name):
    out = jax.block_until_ready(adaptive_projection(x, w1, b1, w2, b2, T))
    B, _, D = x.shape
    assert out.shape == (B, T, D), (name, out.shape)
    ref_bf16 = adaptive_projection_ref(x, w1, b1, w2, b2, T,
                                       compute_dtype=jnp.bfloat16)
    ref_f32 = adaptive_projection_ref(x, w1, b1, w2, b2, T)
    assert jnp.allclose(out, ref_bf16, atol=2e-3, rtol=2e-3), f"mismatch ({name})"
    assert jnp.allclose(out, ref_f32, atol=1e-1, rtol=5e-2), f"gross mismatch ({name})"


if __name__ == "__main__":
    key = jax.random.PRNGKey(0)
    k_a, k_c = jax.random.split(key, 2)

    # Case A: small D (padded to 128 lanes), S % T == 0.
    B, S, D, T = 2, 16, 32, 8
    kx, kp = jax.random.split(k_a)
    x = jax.random.normal(kx, (B, S, D), dtype=jnp.float32)
    w1, b1, w2, b2 = _make_params(kp, D)
    _check(x, w1, b1, w2, b2, T, "padded-D, even windows")

    # Case B: ragged S/T (T=6 -> Tp=8 via zero pooling rows).
    _check(x, w1, b1, w2, b2, 6, "padded-D, ragged windows")

    # Case C: D already a lane multiple and B % Bb == 0 -> no x pad/cast pass.
    B2, S2, D2, T2 = 4, 16, 128, 8
    kx2, kp2 = jax.random.split(k_c)
    x2 = jax.random.normal(kx2, (B2, S2, D2), dtype=jnp.float32)
    w1b, b1b, w2b, b2b = _make_params(kp2, D2)
    _check(x2, w1b, b1b, w2b, b2b, T2, "aligned-D fast path")

    print("KERNEL_OK")
</pallas_src>

<mosaic_0001>
module attributes {stable_mosaic.version = 11 : i64} {
  func.func @_adaptive_projection_kernel(%arg0: i32, %arg1: memref<8x16xbf16, #tpu.memory_space<vmem>>, %arg2: memref<1x16x128xf32, #tpu.memory_space<vmem>>, %arg3: memref<128x128xbf16, #tpu.memory_space<vmem>>, %arg4: memref<1x128xf32, #tpu.memory_space<vmem>>, %arg5: memref<128x128xbf16, #tpu.memory_space<vmem>>, %arg6: memref<1x128xf32, #tpu.memory_space<vmem>>, %arg7: memref<8x128xf32, #tpu.memory_space<vmem>>, %arg8: memref<8x128xf32, #tpu.memory_space<vmem>>) attributes {dimension_semantics = [#tpu.dimension_semantics<parallel>], iteration_bounds = array<i64: 2>, scalar_prefetch = 0 : i64, scratch_operands = 1 : i64, tpu.core_type = #tpu.core_type<tc>, window_params = [{pipeline_mode = #tpu.pipeline_mode<synchronous>, transform_indices = @transform_0, window_bounds = array<i64: 8, 16>}, {transform_indices = @transform_1, window_bounds = array<i64: 1, 16, 128>}, {pipeline_mode = #tpu.pipeline_mode<synchronous>, transform_indices = @transform_2, window_bounds = array<i64: 128, 128>}, {pipeline_mode = #tpu.pipeline_mode<synchronous>, transform_indices = @transform_3, window_bounds = array<i64: 1, 128>}, {pipeline_mode = #tpu.pipeline_mode<synchronous>, transform_indices = @transform_4, window_bounds = array<i64: 128, 128>}, {pipeline_mode = #tpu.pipeline_mode<synchronous>, transform_indices = @transform_5, window_bounds = array<i64: 1, 128>}, {transform_indices = @transform_6, window_bounds = array<i64: 8, 128>}]} {
    %c0 = arith.constant 0 : index
    %c0_0 = arith.constant 0 : index
    %0 = vector.load %arg1[%c0, %c0_0] : memref<8x16xbf16, #tpu.memory_space<vmem>>, vector<8x16xbf16>
    %c0_i32 = arith.constant 0 : i32
    %c8_i32 = arith.constant 8 : i32
    %1 = arith.muli %c0_i32, %c8_i32 : i32
    %2 = tpu.assume_multiple %1, 8 : i32
    %3 = arith.index_cast %c0_i32 : i32 to index
    %c0_1 = arith.constant 0 : index
    %c0_2 = arith.constant 0 : index
    %4 = vector.load %arg2[%3, %c0_1, %c0_2] : memref<1x16x128xf32, #tpu.memory_space<vmem>>, vector<1x16x128xf32>
    %5 = vector.shape_cast %4 : vector<1x16x128xf32> to vector<16x128xf32>
    %6 = arith.truncf %5 : vector<16x128xf32> to vector<16x128xbf16>
    %cst = arith.constant dense<0.000000e+00> : vector<8x128xf32>
    %7 = tpu.matmul %0, %6, %cst {dimension_numbers = #tpu.dot_dimension_numbers<[1], [0], [0], [1], [0, 0, 1, 1], [], []>} : vector<8x16xbf16>, vector<16x128xbf16>, vector<8x128xf32> -> vector<8x128xf32>
    %8 = arith.index_cast %2 : i32 to index
    %c0_3 = arith.constant 0 : index
    %9 = vector.load %arg8[%8, %c0_3] : memref<8x128xf32, #tpu.memory_space<vmem>>, vector<8x128xf32>
    tpu.vector_store %arg8[%8, %c0_3], %7 {strides = array<i32>} : memref<8x128xf32, #tpu.memory_space<vmem>>, vector<8x128xf32>,
    %c1_i32 = arith.constant 1 : i32
    %c0_4 = arith.constant 0 : index
    %c0_5 = arith.constant 0 : index
    %10 = vector.load %arg8[%c0_4, %c0_5] : memref<8x128xf32, #tpu.memory_space<vmem>>, vector<8x128xf32>
    %11 = arith.truncf %10 : vector<8x128xf32> to vector<8x128xbf16>
    %c0_6 = arith.constant 0 : index
    %c0_7 = arith.constant 0 : index
    %12 = vector.load %arg3[%c0_6, %c0_7] : memref<128x128xbf16, #tpu.memory_space<vmem>>, vector<128x128xbf16>
    %cst_8 = arith.constant dense<0.000000e+00> : vector<8x128xf32>
    %13 = tpu.matmul %11, %12, %cst_8 {dimension_numbers = #tpu.dot_dimension_numbers<[1], [0], [0], [1], [0, 0, 1, 1], [], []>} : vector<8x128xbf16>, vector<128x128xbf16>, vector<8x128xf32> -> vector<8x128xf32>
    %c0_9 = arith.constant 0 : index
    %c0_10 = arith.constant 0 : index
    %14 = vector.load %arg4[%c0_9, %c0_10] : memref<1x128xf32, #tpu.memory_space<vmem>>, vector<1x128xf32>
    %15 = vector.broadcast %14 : vector<1x128xf32> to vector<8x128xf32>
    %16 = arith.addf %13, %15 : vector<8x128xf32>
    %cst_11 = arith.constant 2.000000e+01 : f32
    %17 = vector.broadcast %cst_11 : f32 to vector<8x128xf32>
    %18 = arith.minimumf %16, %17 : vector<8x128xf32>
    %19 = math.exp %18 : vector<8x128xf32>
    %cst_12 = arith.constant 2.000000e+00 : f32
    %20 = vector.broadcast %cst_12 : f32 to vector<8x128xf32>
    %21 = arith.addf %19, %20 : vector<8x128xf32>
    %22 = arith.mulf %19, %21 : vector<8x128xf32>
    %cst_13 = arith.constant 2.000000e+01 : f32
    %23 = vector.broadcast %cst_13 : f32 to vector<8x128xf32>
    %24 = arith.cmpf ogt, %16, %23 : vector<8x128xf32>
    %25 = arith.mulf %16, %22 : vector<8x128xf32>
    %cst_14 = arith.constant 2.000000e+00 : f32
    %26 = vector.broadcast %cst_14 : f32 to vector<8x128xf32>
    %27 = arith.addf %22, %26 : vector<8x128xf32>
    %28 = arith.divf %25, %27 : vector<8x128xf32>
    %29 = arith.select %24, %16, %28 : vector<8x128xi1>, vector<8x128xf32>
    %30 = arith.truncf %29 : vector<8x128xf32> to vector<8x128xbf16>
    %c0_15 = arith.constant 0 : index
    %c0_16 = arith.constant 0 : index
    %31 = vector.load %arg5[%c0_15, %c0_16] : memref<128x128xbf16, #tpu.memory_space<vmem>>, vector<128x128xbf16>
    %cst_17 = arith.constant dense<0.000000e+00> : vector<8x128xf32>
    %32 = tpu.matmul %30, %31, %cst_17 {dimension_numbers = #tpu.dot_dimension_numbers<[1], [0], [0], [1], [0, 0, 1, 1], [], []>} : vector<8x128xbf16>, vector<128x128xbf16>, vector<8x128xf32> -> vector<8x128xf32>
    %c0_18 = arith.constant 0 : index
    %c0_19 = arith.constant 0 : index
    %33 = vector.load %arg6[%c0_18, %c0_19] : memref<1x128xf32, #tpu.memory_space<vmem>>, vector<1x128xf32>
    %34 = vector.broadcast %33 : vector<1x128xf32> to vector<8x128xf32>
    %35 = arith.addf %32, %34 : vector<8x128xf32>
    %c0_20 = arith.constant 0 : index
    %c0_21 = arith.constant 0 : index
    %36 = vector.load %arg7[%c0_20, %c0_21] : memref<8x128xf32, #tpu.memory_space<vmem>>, vector<8x128xf32>
    tpu.vector_store %arg7[%c0_20, %c0_21], %35 {strides = array<i32>} : memref<8x128xf32, #tpu.memory_space<vmem>>, vector<8x128xf32>,
    return
  }
  func.func @transform_0(%arg0: i32) -> (i32, i32) {
    %c0_i32 = arith.constant 0 : i32
    %c0_i32_0 = arith.constant 0 : i32
    %c0_i32_1 = arith.constant 0 : i32
    return %c0_i32, %c0_i32_0 : i32, i32
  }
  func.func @transform_1(%arg0: i32) -> (i32, i32, i32) {
    %c0_i32 = arith.constant 0 : i32
    %c0_i32_0 = arith.constant 0 : i32
    %c0_i32_1 = arith.constant 0 : i32
    return %arg0, %c0_i32, %c0_i32_0 : i32, i32, i32
  }
  func.func @transform_2(%arg0: i32) -> (i32, i32) {
    %c0_i32 = arith.constant 0 : i32
    %c0_i32_0 = arith.constant 0 : i32
    %c0_i32_1 = arith.constant 0 : i32
    return %c0_i32, %c0_i32_0 : i32, i32
  }
  func.func @transform_3(%arg0: i32) -> (i32, i32) {
    %c0_i32 = arith.constant 0 : i32
    %c0_i32_0 = arith.constant 0 : i32
    %c0_i32_1 = arith.constant 0 : i32
    return %c0_i32, %c0_i32_0 : i32, i32
  }
  func.func @transform_4(%arg0: i32) -> (i32, i32) {
    %c0_i32 = arith.constant 0 : i32
    %c0_i32_0 = arith.constant 0 : i32
    %c0_i32_1 = arith.constant 0 : i32
    return %c0_i32, %c0_i32_0 : i32, i32
  }
  func.func @transform_5(%arg0: i32) -> (i32, i32) {
    %c0_i32 = arith.constant 0 : i32
    %c0_i32_0 = arith.constant 0 : i32
    %c0_i32_1 = arith.constant 0 : i32
    return %c0_i32, %c0_i32_0 : i32, i32
  }
  func.func @transform_6(%arg0: i32) -> (i32, i32) {
    %c0_i32 = arith.constant 0 : i32
    %c0_i32_0 = arith.constant 0 : i32
    return %arg0, %c0_i32 : i32, i32
  }
}

module attributes {stable_mosaic.version = 11 : i64} {
  func.func @_adaptive_projection_kernel(%arg0: i32, %arg1: memref<8x16xbf16, #tpu.memory_space<vmem>>, %arg2: memref<1x16x128xf32, #tpu.memory_space<vmem>>, %arg3: memref<128x128xbf16, #tpu.memory_space<vmem>>, %arg4: memref<1x128xf32, #tpu.memory_space<vmem>>, %arg5: memref<128x128xbf16, #tpu.memory_space<vmem>>, %arg6: memref<1x128xf32, #tpu.memory_space<vmem>>, %arg7: memref<8x128xf32, #tpu.memory_space<vmem>>, %arg8: memref<8x128xf32, #tpu.memory_space<vmem>>) attributes {dimension_semantics = [#tpu.dimension_semantics<parallel>], iteration_bounds = array<i64: 2>, scalar_prefetch = 0 : i64, scratch_operands = 1 : i64, tpu.core_type = #tpu.core_type<tc>, window_params = [{pipeline_mode = #tpu.pipeline_mode<synchronous>, transform_indices = @transform_0, window_bounds = array<i64: 8, 16>}, {transform_indices = @transform_1, window_bounds = array<i64: 1, 16, 128>}, {pipeline_mode = #tpu.pipeline_mode<synchronous>, transform_indices = @transform_2, window_bounds = array<i64: 128, 128>}, {pipeline_mode = #tpu.pipeline_mode<synchronous>, transform_indices = @transform_3, window_bounds = array<i64: 1, 128>}, {pipeline_mode = #tpu.pipeline_mode<synchronous>, transform_indices = @transform_4, window_bounds = array<i64: 128, 128>}, {pipeline_mode = #tpu.pipeline_mode<synchronous>, transform_indices = @transform_5, window_bounds = array<i64: 1, 128>}, {transform_indices = @transform_6, window_bounds = array<i64: 8, 128>}]} {
    %c0 = arith.constant 0 : index
    %c0_0 = arith.constant 0 : index
    %0 = vector.load %arg1[%c0, %c0_0] : memref<8x16xbf16, #tpu.memory_space<vmem>>, vector<8x16xbf16>
    %c0_i32 = arith.constant 0 : i32
    %c8_i32 = arith.constant 8 : i32
    %1 = arith.muli %c0_i32, %c8_i32 : i32
    %2 = tpu.assume_multiple %1, 8 : i32
    %3 = arith.index_cast %c0_i32 : i32 to index
    %c0_1 = arith.constant 0 : index
    %c0_2 = arith.constant 0 : index
    %4 = vector.load %arg2[%3, %c0_1, %c0_2] : memref<1x16x128xf32, #tpu.memory_space<vmem>>, vector<1x16x128xf32>
    %5 = vector.shape_cast %4 : vector<1x16x128xf32> to vector<16x128xf32>
    %6 = arith.truncf %5 : vector<16x128xf32> to vector<16x128xbf16>
    %cst = arith.constant dense<0.000000e+00> : vector<8x128xf32>
    %7 = tpu.matmul %0, %6, %cst {dimension_numbers = #tpu.dot_dimension_numbers<[1], [0], [0], [1], [0, 0, 1, 1], [], []>} : vector<8x16xbf16>, vector<16x128xbf16>, vector<8x128xf32> -> vector<8x128xf32>
    %8 = arith.index_cast %2 : i32 to index
    %c0_3 = arith.constant 0 : index
    %9 = vector.load %arg8[%8, %c0_3] : memref<8x128xf32, #tpu.memory_space<vmem>>, vector<8x128xf32>
    tpu.vector_store %arg8[%8, %c0_3], %7 {strides = array<i32>} : memref<8x128xf32, #tpu.memory_space<vmem>>, vector<8x128xf32>,
    %c1_i32 = arith.constant 1 : i32
    %c0_4 = arith.constant 0 : index
    %c0_5 = arith.constant 0 : index
    %10 = vector.load %arg8[%c0_4, %c0_5] : memref<8x128xf32, #tpu.memory_space<vmem>>, vector<8x128xf32>
    %11 = arith.truncf %10 : vector<8x128xf32> to vector<8x128xbf16>
    %c0_6 = arith.constant 0 : index
    %c0_7 = arith.constant 0 : index
    %12 = vector.load %arg3[%c0_6, %c0_7] : memref<128x128xbf16, #tpu.memory_space<vmem>>, vector<128x128xbf16>
    %cst_8 = arith.constant dense<0.000000e+00> : vector<8x128xf32>
    %13 = tpu.matmul %11, %12, %cst_8 {dimension_numbers = #tpu.dot_dimension_numbers<[1], [0], [0], [1], [0, 0, 1, 1], [], []>} : vector<8x128xbf16>, vector<128x128xbf16>, vector<8x128xf32> -> vector<8x128xf32>
    %c0_9 = arith.constant 0 : index
    %c0_10 = arith.constant 0 : index
    %14 = vector.load %arg4[%c0_9, %c0_10] : memref<1x128xf32, #tpu.memory_space<vmem>>, vector<1x128xf32>
    %15 = vector.broadcast %14 : vector<1x128xf32> to vector<8x128xf32>
    %16 = arith.addf %13, %15 : vector<8x128xf32>
    %cst_11 = arith.constant 2.000000e+01 : f32
    %17 = vector.broadcast %cst_11 : f32 to vector<8x128xf32>
    %18 = arith.minimumf %16, %17 : vector<8x128xf32>
    %19 = math.exp %18 : vector<8x128xf32>
    %cst_12 = arith.constant 2.000000e+00 : f32
    %20 = vector.broadcast %cst_12 : f32 to vector<8x128xf32>
    %21 = arith.addf %19, %20 : vector<8x128xf32>
    %22 = arith.mulf %19, %21 : vector<8x128xf32>
    %cst_13 = arith.constant 2.000000e+01 : f32
    %23 = vector.broadcast %cst_13 : f32 to vector<8x128xf32>
    %24 = arith.cmpf ogt, %16, %23 : vector<8x128xf32>
    %25 = arith.mulf %16, %22 : vector<8x128xf32>
    %cst_14 = arith.constant 2.000000e+00 : f32
    %26 = vector.broadcast %cst_14 : f32 to vector<8x128xf32>
    %27 = arith.addf %22, %26 : vector<8x128xf32>
    %28 = arith.divf %25, %27 : vector<8x128xf32>
    %29 = arith.select %24, %16, %28 : vector<8x128xi1>, vector<8x128xf32>
    %30 = arith.truncf %29 : vector<8x128xf32> to vector<8x128xbf16>
    %c0_15 = arith.constant 0 : index
    %c0_16 = arith.constant 0 : index
    %31 = vector.load %arg5[%c0_15, %c0_16] : memref<128x128xbf16, #tpu.memory_space<vmem>>, vector<128x128xbf16>
    %cst_17 = arith.constant dense<0.000000e+00> : vector<8x128xf32>
    %32 = tpu.matmul %30, %31, %cst_17 {dimension_numbers = #tpu.dot_dimension_numbers<[1], [0], [0], [1], [0, 0, 1, 1], [], []>} : vector<8x128xbf16>, vector<128x128xbf16>, vector<8x128xf32> -> vector<8x128xf32>
    %c0_18 = arith.constant 0 : index
    %c0_19 = arith.constant 0 : index
    %33 = vector.load %arg6[%c0_18, %c0_19] : memref<1x128xf32, #tpu.memory_space<vmem>>, vector<1x128xf32>
    %34 = vector.broadcast %33 : vector<1x128xf32> to vector<8x128xf32>
    %35 = arith.addf %32, %34 : vector<8x128xf32>
    %c0_20 = arith.constant 0 : index
    %c0_21 = arith.constant 0 : index
    %36 = vector.load %arg7[%c0_20, %c0_21] : memref<8x128xf32, #tpu.memory_space<vmem>>, vector<8x128xf32>
    tpu.vector_store %arg7[%c0_20, %c0_21], %35 {strides = array<i32>} : memref<8x128xf32, #tpu.memory_space<vmem>>, vector<8x128xf32>,
    return
  }
  func.func @transform_0(%arg0: i32) -> (i32, i32) {
    %c0_i32 = arith.constant 0 : i32
    %c0_i32_0 = arith.constant 0 : i32
    %c0_i32_1 = arith.constant 0 : i32
    return %c0_i32, %c0_i32_0 : i32, i32
  }
  func.func @transform_1(%arg0: i32) -> (i32, i32, i32) {
    %c0_i32 = arith.constant 0 : i32
    %c0_i32_0 = arith.constant 0 : i32
    %c0_i32_1 = arith.constant 0 : i32
    return %arg0, %c0_i32, %c0_i32_0 : i32, i32, i32
  }
  func.func @transform_2(%arg0: i32) -> (i32, i32) {
    %c0_i32 = arith.constant 0 : i32
    %c0_i32_0 = arith.constant 0 : i32
    %c0_i32_1 = arith.constant 0 : i32
    return %c0_i32, %c0_i32_0 : i32, i32
  }
  func.func @transform_3(%arg0: i32) -> (i32, i32) {
    %c0_i32 = arith.constant 0 : i32
    %c0_i32_0 = arith.constant 0 : i32
    %c0_i32_1 = arith.constant 0 : i32
    return %c0_i32, %c0_i32_0 : i32, i32
  }
  func.func @transform_4(%arg0: i32) -> (i32, i32) {
    %c0_i32 = arith.constant 0 : i32
    %c0_i32_0 = arith.constant 0 : i32
    %c0_i32_1 = arith.constant 0 : i32
    return %c0_i32, %c0_i32_0 : i32, i32
  }
  func.func @transform_5(%arg0: i32) -> (i32, i32) {
    %c0_i32 = arith.constant 0 : i32
    %c0_i32_0 = arith.constant 0 : i32
    %c0_i32_1 = arith.constant 0 : i32
    return %c0_i32, %c0_i32_0 : i32, i32
  }
  func.func @transform_6(%arg0: i32) -> (i32, i32) {
    %c0_i32 = arith.constant 0 : i32
    %c0_i32_0 = arith.constant 0 : i32
    return %arg0, %c0_i32 : i32, i32
  }
}

</mosaic_0001>

<llo_original>
// kernel: tpu_custom_call.1
$region0: #{tpu_custom_call.1}
  #allocation0 [shape = 'u32[]', space=smem, size = 0x4, offset = 0x4, fixed_abs, tag = 'smem constant byte address 0x4 - core index']
  #allocation1 [shape = 'u32[72,128]{1,0:T(1,128)}', space=vmem, size = 0x9000, scoped, tag = 'internal scratch']
  #allocation2 [shape = 'f32[8,128]{1,0:T(8,128)}', space=vmem, size = 0x1000, scoped, tag = 'scratch operand']
  %s0 = inlined_call_operand.hbm [shape: bf16[8,16], index: 0, kind: input, shape index: {}]
  %s1 = inlined_call_operand.hbm [shape: f32[2,16,128], index: 1, kind: input, shape index: {}]
  %s2 = inlined_call_operand.hbm [shape: bf16[128,128], index: 2, kind: input, shape index: {}]
  %s3 = inlined_call_operand.vmem [shape: f32[1,128], index: 3, kind: input, shape index: {}]
  %s4 = inlined_call_operand.hbm [shape: bf16[128,128], index: 4, kind: input, shape index: {}]
  %s5 = inlined_call_operand.vmem [shape: f32[1,128], index: 5, kind: input, shape index: {}]
  %s6 = inlined_call_operand.hbm [shape: f32[16,128], index: 6, kind: output, shape index: {}]
  %s7 = sld [smem:[#allocation0]]
  $region73: #{tpu_custom_call.1} parent=0
    _
  %s9 = ssub.s32 1, %s7
  %s10 = scalar_select 0, %s9, %s7
  $region1: #{tpu_custom_call.1} parent=0
    #allocation3 [shape = 'u8[2048]{0}', space=vmem, size = 0x800, scoped, tag = 'input window, operand 0, single buffered']
    #allocation4 [shape = 's32[2]{0}', space=sflag, size = 0x8, scoped, tag = 'scoped memory for tpu_custom_call.1']
    #allocation5 [shape = 's32[2]{0}', space=sflag, size = 0x8, scoped, tag = 'scoped memory for tpu_custom_call.1']
    #allocation6 [shape = 'u8[16384]{0}', space=vmem, size = 0x4000, scoped, tag = 'input window, operand 1']
    #allocation7 [shape = 's32[2]{0}', space=sflag, size = 0x8, scoped, tag = 'scoped memory for tpu_custom_call.1']
    #allocation8 [shape = 'u8[32768]{0}', space=vmem, size = 0x8000, scoped, tag = 'input window, operand 2, single buffered']
    #allocation9 [shape = 'u8[32768]{0}', space=vmem, size = 0x8000, scoped, tag = 'input window, operand 4, single buffered']
    #allocation10 [shape = 's32[1]{0}', space=sflag, size = 0x4, scoped, tag = 'scoped memory for tpu_custom_call.1']
    #allocation11 [shape = 'u8[8192]{0}', space=vmem, size = 0x2000, scoped, tag = 'output window, operand 0']
    %11 = vsyncpa [#allocation4], 0
    %12 = vsyncpa [#allocation7], 0
    %s13 = scalar_lea.sflag [#allocation7], 1
    %14 = vsyncpa %s13, 0
    %15 = vsyncpa [#allocation10], 0
    %16 = vsyncpa [#allocation5], 0
    %s17 = scalar_lea.sflag [#allocation5], 1
    %18 = vsyncpa %s17, 0
    loop: start=0, step=1, limit=4
    $region2: #{tpu_custom_call.1} parent=1 // loop_pre_header
      _
    $region3: #{tpu_custom_call.1} parent=1 // loop_header
      %s20 = sphi 0, %s24
      %p21 = scmp.ge.s32.totalorder %s20, 4
      %s28 = sphi 0, %s28
      %s30 = sphi 0, %s28
      %s31 = sphi 0, %s30
      %s45 = sphi 0, %s31
      %s51 = sphi 0, %s53
      %s54 = sphi 0, %s51
      %s55 = sphi 0, %s54
      %s71 = sphi 0, %s55
      %s75 = sphi 0, %s75
      %s77 = sphi 0, %s75
      %s78 = sphi 0, %s77
      %s92 = sphi 0, %s78
      %s96 = sphi 0, %s96
      %s98 = sphi 0, %s96
      %s99 = sphi 0, %s98
      %s113 = sphi 0, %s99
      %s117 = sphi 0, %s117
      %s119 = sphi 0, %s117
      %s120 = sphi 0, %s119
      %s134 = sphi 0, %s120
      %s138 = sphi 0, %s138
      %s140 = sphi 0, %s138
      %s141 = sphi 0, %s140
      %s155 = sphi 0, %s141
      %s161 = sphi 0, %s163
      %s164 = sphi 0, %s161
      %s165 = sphi 0, %s164
      %s181 = sphi 0, %s165
    $region4: #{tpu_custom_call.1} parent=1 // loop_header_branch
      %23 = sbr.rel (%p21) target = $region8
    $region5: #{tpu_custom_call.1} parent=1 // loop_body
      %s25 = ssub.s32 %s20, 1
      %s26 = ssub.s32 %s20, 2
      %s27 = sadd.s32 %s20, 1
      %s29 = sadd.s32 %s28, 1
      %p32 = scmp.eq.s32.totalorder %s20, 1
      %p33 = scmp.ne.s32.totalorder %s28, %s30
      %p34 = scmp.eq.s32.totalorder %s20, 0
      %p35 = por %p33, %p34
      %p36 = scmp.ne.s32.totalorder %s28, %s30
      %p37 = scmp.eq.s32.totalorder %s25, 1
      %p38 = por %p36, %p37
      %p39 = scmp.ne.s32.totalorder %s30, %s31
      %p40 = scmp.eq.s32.totalorder %s25, 0
      %p41 = por %p39, %p40
      %p42 = scmp.ne.s32.totalorder %s30, %s31
      %p43 = scmp.eq.s32.totalorder %s26, 1
      %p44 = por %p42, %p43
      %p46 = scmp.ne.s32.totalorder %s31, %s45
      %p47 = scmp.eq.s32.totalorder %s26, 0
      %p48 = por %p46, %p47
      %s49 = ssub.s32 %s20, %s27
      %p50 = scmp.eq.s32.totalorder %s49, 0
      %s52 = sadd.s32 %s51, 1
      %s53 = scalar_select %p50, %s51, %s52
      %p56 = pneg %p50
      %p57 = scmp.eq.s32.totalorder %s20, 1
      %p58 = por %p56, %p57
      %p59 = scmp.ne.s32.totalorder %s51, %s54
      %p60 = scmp.eq.s32.totalorder %s20, 0
      %p61 = por %p59, %p60
      %p62 = scmp.ne.s32.totalorder %s51, %s54
      %p63 = scmp.eq.s32.totalorder %s25, 1
      %p64 = por %p62, %p63
      %p65 = scmp.ne.s32.totalorder %s54, %s55
      %p66 = scmp.eq.s32.totalorder %s25, 0
      %p67 = por %p65, %p66
      %p68 = scmp.ne.s32.totalorder %s54, %s55
      %p69 = scmp.eq.s32.totalorder %s26, 1
      %p70 = por %p68, %p69
      %p72 = scmp.ne.s32.totalorder %s55, %s71
      %p73 = scmp.eq.s32.totalorder %s26, 0
      %p74 = por %p72, %p73
      %s76 = sadd.s32 %s75, 1
      %p79 = scmp.eq.s32.totalorder %s20, 1
      %p80 = scmp.ne.s32.totalorder %s75, %s77
      %p81 = scmp.eq.s32.totalorder %s20, 0
      %p82 = por %p80, %p81
      %p83 = scmp.ne.s32.totalorder %s75, %s77
      %p84 = scmp.eq.s32.totalorder %s25, 1
      %p85 = por %p83, %p84
      %p86 = scmp.ne.s32.totalorder %s77, %s78
      %p87 = scmp.eq.s32.totalorder %s25, 0
      %p88 = por %p86, %p87
      %p89 = scmp.ne.s32.totalorder %s77, %s78
      %p90 = scmp.eq.s32.totalorder %s26, 1
      %p91 = por %p89, %p90
      %p93 = scmp.ne.s32.totalorder %s78, %s92
      %p94 = scmp.eq.s32.totalorder %s26, 0
      %p95 = por %p93, %p94
      %s97 = sadd.s32 %s96, 1
      %p100 = scmp.eq.s32.totalorder %s20, 1
      %p101 = scmp.ne.s32.totalorder %s96, %s98
      %p102 = scmp.eq.s32.totalorder %s20, 0
      %p103 = por %p101, %p102
      %p104 = scmp.ne.s32.totalorder %s96, %s98
      %p105 = scmp.eq.s32.totalorder %s25, 1
      %p106 = por %p104, %p105
      %p107 = scmp.ne.s32.totalorder %s98, %s99
      %p108 = scmp.eq.s32.totalorder %s25, 0
      %p109 = por %p107, %p108
      %p110 = scmp.ne.s32.totalorder %s98, %s99
      %p111 = scmp.eq.s32.totalorder %s26, 1
      %p112 = por %p110, %p111
      %p114 = scmp.ne.s32.totalorder %s99, %s113
      %p115 = scmp.eq.s32.totalorder %s26, 0
      %p116 = por %p114, %p115
      %s118 = sadd.s32 %s117, 1
      %p121 = scmp.eq.s32.totalorder %s20, 1
      %p122 = scmp.ne.s32.totalorder %s117, %s119
      %p123 = scmp.eq.s32.totalorder %s20, 0
      %p124 = por %p122, %p123
      %p125 = scmp.ne.s32.totalorder %s117, %s119
      %p126 = scmp.eq.s32.totalorder %s25, 1
      %p127 = por %p125, %p126
      %p128 = scmp.ne.s32.totalorder %s119, %s120
      %p129 = scmp.eq.s32.totalorder %s25, 0
      %p130 = por %p128, %p129
      %p131 = scmp.ne.s32.totalorder %s119, %s120
      %p132 = scmp.eq.s32.totalorder %s26, 1
      %p133 = por %p131, %p132
      %p135 = scmp.ne.s32.totalorder %s120, %s134
      %p136 = scmp.eq.s32.totalorder %s26, 0
      %p137 = por %p135, %p136
      %s139 = sadd.s32 %s138, 1
      %p142 = scmp.eq.s32.totalorder %s20, 1
      %p143 = scmp.ne.s32.totalorder %s138, %s140
      %p144 = scmp.eq.s32.totalorder %s20, 0
      %p145 = por %p143, %p144
      %p146 = scmp.ne.s32.totalorder %s138, %s140
      %p147 = scmp.eq.s32.totalorder %s25, 1
      %p148 = por %p146, %p147
      %p149 = scmp.ne.s32.totalorder %s140, %s141
      %p150 = scmp.eq.s32.totalorder %s25, 0
      %p151 = por %p149, %p150
      %p152 = scmp.ne.s32.totalorder %s140, %s141
      %p153 = scmp.eq.s32.totalorder %s26, 1
      %p154 = por %p152, %p153
      %p156 = scmp.ne.s32.totalorder %s141, %s155
      %p157 = scmp.eq.s32.totalorder %s26, 0
      %p158 = por %p156, %p157
      %s159 = ssub.s32 %s20, %s27
      %p160 = scmp.eq.s32.totalorder %s159, 0
      %s162 = sadd.s32 %s161, 1
      %s163 = scalar_select %p160, %s161, %s162
      %p166 = pneg %p160
      %p167 = scmp.eq.s32.totalorder %s20, 1
      %p168 = por %p166, %p167
      %p169 = scmp.ne.s32.totalorder %s161, %s164
      %p170 = scmp.eq.s32.totalorder %s20, 0
      %p171 = por %p169, %p170
      %p172 = scmp.ne.s32.totalorder %s161, %s164
      %p173 = scmp.eq.s32.totalorder %s25, 1
      %p174 = por %p172, %p173
      %p175 = scmp.ne.s32.totalorder %s164, %s165
      %p176 = scmp.eq.s32.totalorder %s25, 0
      %p177 = por %p175, %p176
      %p178 = scmp.ne.s32.totalorder %s164, %s165
      %p179 = scmp.eq.s32.totalorder %s26, 1
      %p180 = por %p178, %p179
      %p182 = scmp.ne.s32.totalorder %s165, %s181
      %p183 = scmp.eq.s32.totalorder %s26, 0
      %p184 = por %p182, %p183
      %p185 = scmp.le.s32.totalorder 1, %s20
      %p186 = scmp.lt.s32.totalorder %s20, 3
      %p187 = pnand %p185, %p186
      %p188 = pneg %p187
      // Predicated region
      $region9: #{tpu_custom_call.1} parent=5 // pred_check
        _
      $region10: #{tpu_custom_call.1} parent=5 // pred_check_branch
        %190 = sbr.rel (%p187) target = $region12
      $region11: #{tpu_custom_call.1} parent=5 // pred_region
        %s191 = ssub.s32 %s20, 1
        // Predicated region
        $region13: #{tpu_custom_call.1} parent=11 // pred_check
          %p192 = pneg %p41
        $region14: #{tpu_custom_call.1} parent=11 // pred_check_branch
          %194 = sbr.rel (%p192) target = $region16
        $region15: #{tpu_custom_call.1} parent=11 // pred_region
          %196 = vsyncadd [#allocation4], 0
          %s198 = sshll.u32 %s0, 4
          %s199 = int_to_ptr.hbm [resolvable:$true] %s198
          %s200 = sshll.u32 [#allocation3], 4
          %s201 = int_to_ptr.vmem [resolvable:$true] %s200
          %203 = dma.hbm_to_vmem [thread:$0]  %s199, 64, %s201, [#allocation4]
        $region16: #{tpu_custom_call.1} parent=11 // pred_fallthru
          _
        // Predicated region
        $region17: #{tpu_custom_call.1} parent=11 // pred_check
          %p204 = pneg %p88
        $region18: #{tpu_custom_call.1} parent=11 // pred_check_branch
          %206 = sbr.rel (%p204) target = $region20
        $region19: #{tpu_custom_call.1} parent=11 // pred_region
          %208 = vsyncadd [#allocation7], 0
          %s209 = sshll.u32 %s2, 4
          %s210 = int_to_ptr.hbm [resolvable:$true] %s209
          %s211 = sshll.u32 [#allocation8], 4
          %s212 = int_to_ptr.vmem [resolvable:$true] %s211
          %217 = dma.hbm_to_vmem [thread:$0]  %s210, 1024, %s212, [#allocation7], 64, 64, 4
        $region20: #{tpu_custom_call.1} parent=11 // pred_fallthru
          _
        // Predicated region
        $region21: #{tpu_custom_call.1} parent=11 // pred_check
          %p218 = pneg %p109
        $region22: #{tpu_custom_call.1} parent=11 // pred_check_branch
          %220 = sbr.rel (%p218) target = $region24
        $region23: #{tpu_custom_call.1} parent=11 // pred_region
          _
        $region24: #{tpu_custom_call.1} parent=11 // pred_fallthru
          _
        // Predicated region
        $region25: #{tpu_custom_call.1} parent=11 // pred_check
          %p221 = pneg %p130
        $region26: #{tpu_custom_call.1} parent=11 // pred_check_branch
          %223 = sbr.rel (%p221) target = $region28
        $region27: #{tpu_custom_call.1} parent=11 // pred_region
          %225 = vsyncadd [#allocation10], 0
          %s226 = sshll.u32 %s4, 4
          %s227 = int_to_ptr.hbm [resolvable:$true] %s226
          %s228 = sshll.u32 [#allocation9], 4
          %s229 = int_to_ptr.vmem [resolvable:$true] %s228
          %234 = dma.hbm_to_vmem [thread:$0]  %s227, 1024, %s229, [#allocation10], 64, 64, 4
        $region28: #{tpu_custom_call.1} parent=11 // pred_fallthru
          _
        // Predicated region
        $region29: #{tpu_custom_call.1} parent=11 // pred_check
          %p235 = pneg %p151
        $region30: #{tpu_custom_call.1} parent=11 // pred_check_branch
          %237 = sbr.rel (%p235) target = $region32
        $region31: #{tpu_custom_call.1} parent=11 // pred_region
          _
        $region32: #{tpu_custom_call.1} parent=11 // pred_fallthru
          _
      $region12: #{tpu_custom_call.1} parent=5 // pred_fallthru
        _
      %p238 = scmp.lt.s32.totalorder %s20, 2
      // Predicated region
      $region33: #{tpu_custom_call.1} parent=5 // pred_check
        %p239 = pneg %p238
      $region34: #{tpu_custom_call.1} parent=5 // pred_check_branch
        %241 = sbr.rel (%p239) target = $region36
      $region35: #{tpu_custom_call.1} parent=5 // pred_region
        // Predicated region
        $region37: #{tpu_custom_call.1} parent=35 // pred_check
          %p242 = pneg %p61
        $region38: #{tpu_custom_call.1} parent=35 // pred_check_branch
          %244 = sbr.rel (%p242) target = $region40
        $region39: #{tpu_custom_call.1} parent=35 // pred_region
          %s245 = sand.u32 %s20, 1
          %s246 = scalar_lea.sflag [#allocation7], %s245
          %s247 = sand.u32 %s51, 1
          %s248 = smul.addr %s247, 16
          %s249 = scalar_lea.vmem [#allocation6], %s248
          %251 = vsyncadd %s246, 0
          %s252 = smul.addr %s20, 2
          %s253 = smul.addr %s252, 8
          %s254 = scalar_lea.hbm %s1, %s253
          %s255 = sshll.u32 %s254, 4
          %s256 = int_to_ptr.hbm [resolvable:$true] %s255
          %s257 = sshll.u32 %s249, 4
          %s258 = int_to_ptr.vmem [resolvable:$true] %s257
          %263 = dma.hbm_to_vmem [thread:$0]  %s256, 256, %s258, %s246, 128, 128, 8
        $region40: #{tpu_custom_call.1} parent=35 // pred_fallthru
          _
      $region36: #{tpu_custom_call.1} parent=5 // pred_fallthru
        _
      %p264 = scmp.le.s32.totalorder 1, %s20
      %p265 = scmp.lt.s32.totalorder %s20, 3
      %p266 = pnand %p264, %p265
      %p267 = pneg %p266
      // Predicated region
      $region41: #{tpu_custom_call.1} parent=5 // pred_check
        _
      $region42: #{tpu_custom_call.1} parent=5 // pred_check_branch
        %269 = sbr.rel (%p266) target = $region44
      $region43: #{tpu_custom_call.1} parent=5 // pred_region
        %s270 = ssub.s32 %s20, 1
        // Predicated region
        $region45: #{tpu_custom_call.1} parent=43 // pred_check
          %p271 = pneg %p41
        $region46: #{tpu_custom_call.1} parent=43 // pred_check_branch
          %273 = sbr.rel (%p271) target = $region48
        $region47: #{tpu_custom_call.1} parent=43 // pred_region
          %275 = dma.done [#allocation4], 64
        $region48: #{tpu_custom_call.1} parent=43 // pred_fallthru
          _
        %s276 = sand.u32 %s25, 1
        %s277 = scalar_lea.sflag [#allocation7], %s276
        %s278 = sand.u32 %s54, 1
        %s279 = smul.addr %s278, 16
        %s280 = scalar_lea.vmem [#allocation6], %s279
        // Predicated region
        $region49: #{tpu_custom_call.1} parent=43 // pred_check
          %p281 = pneg %p67
        $region50: #{tpu_custom_call.1} parent=43 // pred_check_branch
          %283 = sbr.rel (%p281) target = $region52
        $region51: #{tpu_custom_call.1} parent=43 // pred_region
          %285 = dma.done %s277, 256
        $region52: #{tpu_custom_call.1} parent=43 // pred_fallthru
          _
        // Predicated region
        $region53: #{tpu_custom_call.1} parent=43 // pred_check
          %p286 = pneg %p88
        $region54: #{tpu_custom_call.1} parent=43 // pred_check_branch
          %288 = sbr.rel (%p286) target = $region56
        $region55: #{tpu_custom_call.1} parent=43 // pred_region
          %290 = dma.done [#allocation7], 1024
        $region56: #{tpu_custom_call.1} parent=43 // pred_fallthru
          _
        // Predicated region
        $region57: #{tpu_custom_call.1} parent=43 // pred_check
          %p291 = pneg %p130
        $region58: #{tpu_custom_call.1} parent=43 // pred_check_branch
          %293 = sbr.rel (%p291) target = $region60
        $region59: #{tpu_custom_call.1} parent=43 // pred_region
          %295 = dma.done [#allocation10], 1024
        $region60: #{tpu_custom_call.1} parent=43 // pred_fallthru
          _
        %p296 = pneg %p41
        %p297 = pneg %p38
        %s298 = sand.u32 %s25, 1
        %s299 = scalar_lea.sflag [#allocation7], %s298
        %s300 = sand.u32 %s54, 1
        %s301 = smul.addr %s300, 16
        %s302 = scalar_lea.vmem [#allocation6], %s301
        %p303 = pneg %p67
        %p304 = pneg %p64
        %p305 = pneg %p88
        %p306 = pneg %p85
        %p307 = pneg %p109
        %p308 = pneg %p106
        %p309 = pneg %p130
        %p310 = pneg %p127
        %p311 = pneg %p151
        %p312 = pneg %p148
        %p313 = pneg %p177
        %p314 = pneg %p174
        %s315 = sand.u32 %s164, 1
        %s316 = scalar_lea.sflag [#allocation5], %s315
        %s317 = sand.u32 %s164, 1
        %s318 = smul.addr %s317, 8
        %s319 = scalar_lea.vmem [#allocation11], %s318
        %v321 = vld [vmem:[#allocation3] sm:$0xf]
        %v322 = vld [vmem:[%s280] sm:$0xff]
        %v323 = vld [vmem:[%s280 + $0x8] sm:$0xff]
        %v324 = vpack.c.bf16 %v323, %v322
        %vm325 = vcmask 130048
        %v327 = vsel %vm325, %v321, 0
        %329 = vmatpush.bf16.msra.mxu0 0
        %330 = vmatpush.bf16.msra.mxu0 0
        %331 = vmatpush.bf16.msra.mxu0 0
        %332 = vmatpush.bf16.msra.mxu0 0
        %333 = vmatpush.bf16.msra.mxu0 0
        %334 = vmatpush.bf16.msra.mxu0 0
        %335 = vmatpush.bf16.msra.mxu0 0
        %336 = vmatpush.bf16.msra.mxu0 %v324
        %337 = vmatmul.bf16.gmra.mxu0 %v327
        %v338 = vpop.f32.mrf.mxu0
        %v339 = vadd.f32 0.0, %v338
        %v340 = vpop.f32.mrf.mxu0
        %341 = vdwg.mxu0
        %342 = vst [vmem:[#allocation2] sm:$0xff] %v339
        %v343 = vld [vmem:[#allocation2] sm:$0xff]
        %v344 = vpack.c.bf16 %v343, %v343
        %v345 = vld [vmem:[#allocation8] sm:$0xf]
        %v346 = vld [vmem:[#allocation8 + $0x4] sm:$0xf]
        %v347 = vld [vmem:[#allocation8 + $0x8] sm:$0xf]
        %v348 = vld [vmem:[#allocation8 + $0xc] sm:$0xf]
        %v349 = vld [vmem:[#allocation8 + $0x10] sm:$0xf]
        %v350 = vld [vmem:[#allocation8 + $0x14] sm:$0xf]
        %v351 = vld [vmem:[#allocation8 + $0x18] sm:$0xf]
        %v352 = vld [vmem:[#allocation8 + $0x1c] sm:$0xf]
        %v353 = vld [vmem:[#allocation8 + $0x20] sm:$0xf]
        %v354 = vld [vmem:[#allocation8 + $0x24] sm:$0xf]
        %v355 = vld [vmem:[#allocation8 + $0x28] sm:$0xf]
        %v356 = vld [vmem:[#allocation8 + $0x2c] sm:$0xf]
        %v357 = vld [vmem:[#allocation8 + $0x30] sm:$0xf]
        %v358 = vld [vmem:[#allocation8 + $0x34] sm:$0xf]
        %v359 = vld [vmem:[#allocation8 + $0x38] sm:$0xf]
        %v360 = vld [vmem:[#allocation8 + $0x3c] sm:$0xf]
        %v361 = vld [vmem:[%s3] sm:$0x1]
        %v363 = vperm.slane %v361, 0
        %v381 = vunpack.c.l.b16 %v345
        %v382 = vunpack.c.l.b16 %v346
        %v383 = vunpack.c.l.b16 %v347
        %v384 = vunpack.c.l.b16 %v348
        %v385 = vunpack.c.l.b16 %v349
        %v386 = vunpack.c.l.b16 %v350
        %v387 = vunpack.c.l.b16 %v351
        %v388 = vunpack.c.l.b16 %v352
        %v389 = vunpack.c.l.b16 %v353
        %v390 = vunpack.c.l.b16 %v354
        %v391 = vunpack.c.l.b16 %v355
        %v392 = vunpack.c.l.b16 %v356
        %v393 = vunpack.c.l.b16 %v357
        %v394 = vunpack.c.l.b16 %v358
        %v395 = vunpack.c.l.b16 %v359
        %v396 = vunpack.c.l.b16 %v360
        %v397 = vpack.c.b16 %v382, %v381
        %v398 = vpack.c.b16 %v384, %v383
        %v399 = vpack.c.b16 %v386, %v385
        %v400 = vpack.c.b16 %v388, %v387
        %v401 = vpack.c.b16 %v390, %v389
        %v402 = vpack.c.b16 %v392, %v391
        %v403 = vpack.c.b16 %v394, %v393
        %v404 = vpack.c.b16 %v396, %v395
        %413 = vmatpush.bf16.msra.mxu0 %v404
        %414 = vmatpush.bf16.msra.mxu0 %v403
        %415 = vmatpush.bf16.msra.mxu0 %v402
        %416 = vmatpush.bf16.msra.mxu0 %v401
        %417 = vmatpush.bf16.msra.mxu0 %v400
        %418 = vmatpush.bf16.msra.mxu0 %v399
        %419 = vmatpush.bf16.msra.mxu0 %v398
        %420 = vmatpush.bf16.msra.mxu0 %v397
        %421 = vmatmul.bf16.gmra.mxu0 %v344
        %v422 = vpop.f32.mrf.mxu0
        %v423 = vadd.f32 %v363, %v422
        %v424 = vpop.f32.mrf.mxu0
        %425 = vdwg.mxu0
        %v426 = vmin.f32 %v423, 20.0
        %v427 = vmul.f32 %v426, 1.442695
        %v428 = vpow.pop %v427
        %v429 = vadd.f32 %v428, 2.0
        %v430 = vmul.f32 %v428, %v429
        %vm431 = vcmp.gt.f32.partialorder %v423, 20.0
        %v432 = vmul.f32 %v423, %v430
        %v433 = vadd.f32 %v430, 2.0
        %v434 = vrcp.pop %v433
        %v435 = vmul.f32 %v433, %v434
        %v436 = vsub.f32 1.0, %v435
        %v437 = vmul.f32 %v434, %v436
        %v438 = vadd.f32 %v434, %v437
        %vm439 = vweird.f32 %v433
        %vm440 = vweird.f32 %v434
        %vm441 = vmor %vm439, %vm440
        %v442 = vsel %vm441, %v434, %v438
        %v443 = vand.u32 2147483647, %v433
        %vm444 = vcmp.eq.f32.partialorder %v443, 8.507059e+37
        %v445 = vand.u32 %v433, 2147483648
        %v446 = vor.u32 1.1754944e-38, %v445
        %v447 = vsel %vm444, %v446, %v442
        %v448 = vmul.f32 %v432, %v447
        %v449 = vsel %vm431, %v423, %v448
        %v450 = vpack.c.bf16 %v449, %v449
        %v451 = vld [vmem:[#allocation9] sm:$0xf]
        %v452 = vld [vmem:[#allocation9 + $0x4] sm:$0xf]
        %v453 = vld [vmem:[#allocation9 + $0x8] sm:$0xf]
        %v454 = vld [vmem:[#allocation9 + $0xc] sm:$0xf]
        %v455 = vld [vmem:[#allocation9 + $0x10] sm:$0xf]
        %v456 = vld [vmem:[#allocation9 + $0x14] sm:$0xf]
        %v457 = vld [vmem:[#allocation9 + $0x18] sm:$0xf]
        %v458 = vld [vmem:[#allocation9 + $0x1c] sm:$0xf]
        %v459 = vld [vmem:[#allocation9 + $0x20] sm:$0xf]
        %v460 = vld [vmem:[#allocation9 + $0x24] sm:$0xf]
        %v461 = vld [vmem:[#allocation9 + $0x28] sm:$0xf]
        %v462 = vld [vmem:[#allocation9 + $0x2c] sm:$0xf]
        %v463 = vld [vmem:[#allocation9 + $0x30] sm:$0xf]
        %v464 = vld [vmem:[#allocation9 + $0x34] sm:$0xf]
        %v465 = vld [vmem:[#allocation9 + $0x38] sm:$0xf]
        %v466 = vld [vmem:[#allocation9 + $0x3c] sm:$0xf]
        %v467 = vld [vmem:[%s5] sm:$0x1]
        %v469 = vperm.slane %v467, 0
        %v487 = vunpack.c.l.b16 %v451
        %v488 = vunpack.c.l.b16 %v452
        %v489 = vunpack.c.l.b16 %v453
        %v490 = vunpack.c.l.b16 %v454
        %v491 = vunpack.c.l.b16 %v455
        %v492 = vunpack.c.l.b16 %v456
        %v493 = vunpack.c.l.b16 %v457
        %v494 = vunpack.c.l.b16 %v458
        %v495 = vunpack.c.l.b16 %v459
        %v496 = vunpack.c.l.b16 %v460
        %v497 = vunpack.c.l.b16 %v461
        %v498 = vunpack.c.l.b16 %v462
        %v499 = vunpack.c.l.b16 %v463
        %v500 = vunpack.c.l.b16 %v464
        %v501 = vunpack.c.l.b16 %v465
        %v502 = vunpack.c.l.b16 %v466
        %v503 = vpack.c.b16 %v488, %v487
        %v504 = vpack.c.b16 %v490, %v489
        %v505 = vpack.c.b16 %v492, %v491
        %v506 = vpack.c.b16 %v494, %v493
        %v507 = vpack.c.b16 %v496, %v495
        %v508 = vpack.c.b16 %v498, %v497
        %v509 = vpack.c.b16 %v500, %v499
        %v510 = vpack.c.b16 %v502, %v501
        %519 = vmatpush.bf16.msra.mxu0 %v510
        %520 = vmatpush.bf16.msra.mxu0 %v509
        %521 = vmatpush.bf16.msra.mxu0 %v508
        %522 = vmatpush.bf16.msra.mxu0 %v507
        %523 = vmatpush.bf16.msra.mxu0 %v506
        %524 = vmatpush.bf16.msra.mxu0 %v505
        %525 = vmatpush.bf16.msra.mxu0 %v504
        %526 = vmatpush.bf16.msra.mxu0 %v503
        %527 = vmatmul.bf16.gmra.mxu0 %v450
        %v528 = vpop.f32.mrf.mxu0
        %v529 = vadd.f32 %v469, %v528
        %v530 = vpop.f32.mrf.mxu0
        %531 = vdwg.mxu0
        %532 = vst [vmem:[%s319] sm:$0xff] %v529
        %s533 = sand.u32 %s164, 1
        %s534 = scalar_lea.sflag [#allocation5], %s533
        %s535 = sand.u32 %s164, 1
        %s536 = smul.addr %s535, 8
        %s537 = scalar_lea.vmem [#allocation11], %s536
        // Predicated region
        $region61: #{tpu_custom_call.1} parent=43 // pred_check
          %p538 = pneg %p174
        $region62: #{tpu_custom_call.1} parent=43 // pred_check_branch
          %540 = sbr.rel (%p538) target = $region64
        $region63: #{tpu_custom_call.1} parent=43 // pred_region
          %542 = vsyncadd %s534, 0
          %s543 = smul.addr %s25, 8
          %s544 = scalar_lea.hbm %s6, %s543
          %s546 = sshll.u32 %s537, 4
          %s547 = int_to_ptr.vmem [resolvable:$true] %s546
          %s548 = sshll.u32 %s544, 4
          %s549 = int_to_ptr.hbm [resolvable:$true] %s548
          %551 = dma.vmem_to_hbm [thread:$0]  %s547, 128, %s549, %s534
        $region64: #{tpu_custom_call.1} parent=43 // pred_fallthru
          _
      $region44: #{tpu_custom_call.1} parent=5 // pred_fallthru
        _
      %p552 = scmp.le.s32.totalorder 2, %s20
      // Predicated region
      $region65: #{tpu_custom_call.1} parent=5 // pred_check
        %p553 = pneg %p552
      $region66: #{tpu_custom_call.1} parent=5 // pred_check_branch
        %555 = sbr.rel (%p553) target = $region68
      $region67: #{tpu_custom_call.1} parent=5 // pred_region
        %s556 = ssub.s32 %s20, 2
        // Predicated region
        $region69: #{tpu_custom_call.1} parent=67 // pred_check
          %p557 = pneg %p180
        $region70: #{tpu_custom_call.1} parent=67 // pred_check_branch
          %559 = sbr.rel (%p557) target = $region72
        $region71: #{tpu_custom_call.1} parent=67 // pred_region
          %s560 = sand.u32 %s165, 1
          %s561 = scalar_lea.sflag [#allocation5], %s560
          %s562 = sand.u32 %s165, 1
          %s563 = smul.addr %s562, 8
          %s564 = scalar_lea.vmem [#allocation11], %s563
          %566 = dma.done %s561, 128
        $region72: #{tpu_custom_call.1} parent=67 // pred_fallthru
          _
      $region68: #{tpu_custom_call.1} parent=5 // pred_fallthru
        _
    $region6: #{tpu_custom_call.1} parent=1 // loop_footer
      %s24 = sadd.s32 1, %s20
    $region7: #{tpu_custom_call.1} parent=1 // loop_footer_branch
      %19 = sbr.rel target = $region3
    $region8: #{tpu_custom_call.1} parent=1 // loop_exit
      _
    %567 = vsyncpa [#allocation4], 1
    %s568 = scalar_lea.sflag [#allocation4], 1
    %569 = vsyncpa %s568, 1
    %570 = vsyncpa [#allocation7], 1
    %s571 = scalar_lea.sflag [#allocation7], 1
    %572 = vsyncpa %s571, 1
    %573 = vsyncpa [#allocation10], 1
    %574 = vsyncpa [#allocation5], 1
    %s575 = scalar_lea.sflag [#allocation5], 1
    %576 = vsyncpa %s575, 1

// kernel: tpu_custom_call.1
$region0: #{tpu_custom_call.1}
  #allocation0 [shape = 'u32[]', space=smem, size = 0x4, offset = 0x4, fixed_abs, tag = 'smem constant byte address 0x4 - core index']
  #allocation1 [shape = 'u32[72,128]{1,0:T(1,128)}', space=vmem, size = 0x9000, scoped, tag = 'internal scratch']
  #allocation2 [shape = 'f32[8,128]{1,0:T(8,128)}', space=vmem, size = 0x1000, scoped, tag = 'scratch operand']
  %s0 = inlined_call_operand.hbm [shape: bf16[8,16], index: 0, kind: input, shape index: {}]
  %s1 = inlined_call_operand.hbm [shape: f32[2,16,128], index: 1, kind: input, shape index: {}]
  %s2 = inlined_call_operand.hbm [shape: bf16[128,128], index: 2, kind: input, shape index: {}]
  %s3 = inlined_call_operand.vmem [shape: f32[1,128], index: 3, kind: input, shape index: {}]
  %s4 = inlined_call_operand.hbm [shape: bf16[128,128], index: 4, kind: input, shape index: {}]
  %s5 = inlined_call_operand.vmem [shape: f32[1,128], index: 5, kind: input, shape index: {}]
  %s6 = inlined_call_operand.hbm [shape: f32[16,128], index: 6, kind: output, shape index: {}]
  %s7 = sld [smem:[#allocation0]]
  $region73: #{tpu_custom_call.1} parent=0
    _
  %s9 = ssub.s32 1, %s7
  %s10 = scalar_select 0, %s9, %s7
  $region1: #{tpu_custom_call.1} parent=0
    #allocation3 [shape = 'u8[2048]{0}', space=vmem, size = 0x800, scoped, tag = 'input window, operand 0, single buffered']
    #allocation4 [shape = 's32[2]{0}', space=sflag, size = 0x8, scoped, tag = 'scoped memory for tpu_custom_call.1']
    #allocation5 [shape = 's32[2]{0}', space=sflag, size = 0x8, scoped, tag = 'scoped memory for tpu_custom_call.1']
    #allocation6 [shape = 'u8[16384]{0}', space=vmem, size = 0x4000, scoped, tag = 'input window, operand 1']
    #allocation7 [shape = 's32[2]{0}', space=sflag, size = 0x8, scoped, tag = 'scoped memory for tpu_custom_call.1']
    #allocation8 [shape = 'u8[32768]{0}', space=vmem, size = 0x8000, scoped, tag = 'input window, operand 2, single buffered']
    #allocation9 [shape = 'u8[32768]{0}', space=vmem, size = 0x8000, scoped, tag = 'input window, operand 4, single buffered']
    #allocation10 [shape = 's32[1]{0}', space=sflag, size = 0x4, scoped, tag = 'scoped memory for tpu_custom_call.1']
    #allocation11 [shape = 'u8[8192]{0}', space=vmem, size = 0x2000, scoped, tag = 'output window, operand 0']
    %11 = vsyncpa [#allocation4], 0
    %12 = vsyncpa [#allocation7], 0
    %s13 = scalar_lea.sflag [#allocation7], 1
    %14 = vsyncpa %s13, 0
    %15 = vsyncpa [#allocation10], 0
    %16 = vsyncpa [#allocation5], 0
    %s17 = scalar_lea.sflag [#allocation5], 1
    %18 = vsyncpa %s17, 0
    loop: start=0, step=1, limit=4
    $region2: #{tpu_custom_call.1} parent=1 // loop_pre_header
      _
    $region3: #{tpu_custom_call.1} parent=1 // loop_header
      %s20 = sphi 0, %s24
      %p21 = scmp.ge.s32.totalorder %s20, 4
      %s28 = sphi 0, %s28
      %s30 = sphi 0, %s28
      %s31 = sphi 0, %s30
      %s45 = sphi 0, %s31
      %s51 = sphi 0, %s53
      %s54 = sphi 0, %s51
      %s55 = sphi 0, %s54
      %s71 = sphi 0, %s55
      %s75 = sphi 0, %s75
      %s77 = sphi 0, %s75
      %s78 = sphi 0, %s77
      %s92 = sphi 0, %s78
      %s96 = sphi 0, %s96
      %s98 = sphi 0, %s96
      %s99 = sphi 0, %s98
      %s113 = sphi 0, %s99
      %s117 = sphi 0, %s117
      %s119 = sphi 0, %s117
      %s120 = sphi 0, %s119
      %s134 = sphi 0, %s120
      %s138 = sphi 0, %s138
      %s140 = sphi 0, %s138
      %s141 = sphi 0, %s140
      %s155 = sphi 0, %s141
      %s161 = sphi 0, %s163
      %s164 = sphi 0, %s161
      %s165 = sphi 0, %s164
      %s181 = sphi 0, %s165
    $region4: #{tpu_custom_call.1} parent=1 // loop_header_branch
      %23 = sbr.rel (%p21) target = $region8
    $region5: #{tpu_custom_call.1} parent=1 // loop_body
      %s25 = ssub.s32 %s20, 1
      %s26 = ssub.s32 %s20, 2
      %s27 = sadd.s32 %s20, 1
      %s29 = sadd.s32 %s28, 1
      %p32 = scmp.eq.s32.totalorder %s20, 1
      %p33 = scmp.ne.s32.totalorder %s28, %s30
      %p34 = scmp.eq.s32.totalorder %s20, 0
      %p35 = por %p33, %p34
      %p36 = scmp.ne.s32.totalorder %s28, %s30
      %p37 = scmp.eq.s32.totalorder %s25, 1
      %p38 = por %p36, %p37
      %p39 = scmp.ne.s32.totalorder %s30, %s31
      %p40 = scmp.eq.s32.totalorder %s25, 0
      %p41 = por %p39, %p40
      %p42 = scmp.ne.s32.totalorder %s30, %s31
      %p43 = scmp.eq.s32.totalorder %s26, 1
      %p44 = por %p42, %p43
      %p46 = scmp.ne.s32.totalorder %s31, %s45
      %p47 = scmp.eq.s32.totalorder %s26, 0
      %p48 = por %p46, %p47
      %s49 = ssub.s32 %s20, %s27
      %p50 = scmp.eq.s32.totalorder %s49, 0
      %s52 = sadd.s32 %s51, 1
      %s53 = scalar_select %p50, %s51, %s52
      %p56 = pneg %p50
      %p57 = scmp.eq.s32.totalorder %s20, 1
      %p58 = por %p56, %p57
      %p59 = scmp.ne.s32.totalorder %s51, %s54
      %p60 = scmp.eq.s32.totalorder %s20, 0
      %p61 = por %p59, %p60
      %p62 = scmp.ne.s32.totalorder %s51, %s54
      %p63 = scmp.eq.s32.totalorder %s25, 1
      %p64 = por %p62, %p63
      %p65 = scmp.ne.s32.totalorder %s54, %s55
      %p66 = scmp.eq.s32.totalorder %s25, 0
      %p67 = por %p65, %p66
      %p68 = scmp.ne.s32.totalorder %s54, %s55
      %p69 = scmp.eq.s32.totalorder %s26, 1
      %p70 = por %p68, %p69
      %p72 = scmp.ne.s32.totalorder %s55, %s71
      %p73 = scmp.eq.s32.totalorder %s26, 0
      %p74 = por %p72, %p73
      %s76 = sadd.s32 %s75, 1
      %p79 = scmp.eq.s32.totalorder %s20, 1
      %p80 = scmp.ne.s32.totalorder %s75, %s77
      %p81 = scmp.eq.s32.totalorder %s20, 0
      %p82 = por %p80, %p81
      %p83 = scmp.ne.s32.totalorder %s75, %s77
      %p84 = scmp.eq.s32.totalorder %s25, 1
      %p85 = por %p83, %p84
      %p86 = scmp.ne.s32.totalorder %s77, %s78
      %p87 = scmp.eq.s32.totalorder %s25, 0
      %p88 = por %p86, %p87
      %p89 = scmp.ne.s32.totalorder %s77, %s78
      %p90 = scmp.eq.s32.totalorder %s26, 1
      %p91 = por %p89, %p90
      %p93 = scmp.ne.s32.totalorder %s78, %s92
      %p94 = scmp.eq.s32.totalorder %s26, 0
      %p95 = por %p93, %p94
      %s97 = sadd.s32 %s96, 1
      %p100 = scmp.eq.s32.totalorder %s20, 1
      %p101 = scmp.ne.s32.totalorder %s96, %s98
      %p102 = scmp.eq.s32.totalorder %s20, 0
      %p103 = por %p101, %p102
      %p104 = scmp.ne.s32.totalorder %s96, %s98
      %p105 = scmp.eq.s32.totalorder %s25, 1
      %p106 = por %p104, %p105
      %p107 = scmp.ne.s32.totalorder %s98, %s99
      %p108 = scmp.eq.s32.totalorder %s25, 0
      %p109 = por %p107, %p108
      %p110 = scmp.ne.s32.totalorder %s98, %s99
      %p111 = scmp.eq.s32.totalorder %s26, 1
      %p112 = por %p110, %p111
      %p114 = scmp.ne.s32.totalorder %s99, %s113
      %p115 = scmp.eq.s32.totalorder %s26, 0
      %p116 = por %p114, %p115
      %s118 = sadd.s32 %s117, 1
      %p121 = scmp.eq.s32.totalorder %s20, 1
      %p122 = scmp.ne.s32.totalorder %s117, %s119
      %p123 = scmp.eq.s32.totalorder %s20, 0
      %p124 = por %p122, %p123
      %p125 = scmp.ne.s32.totalorder %s117, %s119
      %p126 = scmp.eq.s32.totalorder %s25, 1
      %p127 = por %p125, %p126
      %p128 = scmp.ne.s32.totalorder %s119, %s120
      %p129 = scmp.eq.s32.totalorder %s25, 0
      %p130 = por %p128, %p129
      %p131 = scmp.ne.s32.totalorder %s119, %s120
      %p132 = scmp.eq.s32.totalorder %s26, 1
      %p133 = por %p131, %p132
      %p135 = scmp.ne.s32.totalorder %s120, %s134
      %p136 = scmp.eq.s32.totalorder %s26, 0
      %p137 = por %p135, %p136
      %s139 = sadd.s32 %s138, 1
      %p142 = scmp.eq.s32.totalorder %s20, 1
      %p143 = scmp.ne.s32.totalorder %s138, %s140
      %p144 = scmp.eq.s32.totalorder %s20, 0
      %p145 = por %p143, %p144
      %p146 = scmp.ne.s32.totalorder %s138, %s140
      %p147 = scmp.eq.s32.totalorder %s25, 1
      %p148 = por %p146, %p147
      %p149 = scmp.ne.s32.totalorder %s140, %s141
      %p150 = scmp.eq.s32.totalorder %s25, 0
      %p151 = por %p149, %p150
      %p152 = scmp.ne.s32.totalorder %s140, %s141
      %p153 = scmp.eq.s32.totalorder %s26, 1
      %p154 = por %p152, %p153
      %p156 = scmp.ne.s32.totalorder %s141, %s155
      %p157 = scmp.eq.s32.totalorder %s26, 0
      %p158 = por %p156, %p157
      %s159 = ssub.s32 %s20, %s27
      %p160 = scmp.eq.s32.totalorder %s159, 0
      %s162 = sadd.s32 %s161, 1
      %s163 = scalar_select %p160, %s161, %s162
      %p166 = pneg %p160
      %p167 = scmp.eq.s32.totalorder %s20, 1
      %p168 = por %p166, %p167
      %p169 = scmp.ne.s32.totalorder %s161, %s164
      %p170 = scmp.eq.s32.totalorder %s20, 0
      %p171 = por %p169, %p170
      %p172 = scmp.ne.s32.totalorder %s161, %s164
      %p173 = scmp.eq.s32.totalorder %s25, 1
      %p174 = por %p172, %p173
      %p175 = scmp.ne.s32.totalorder %s164, %s165
      %p176 = scmp.eq.s32.totalorder %s25, 0
      %p177 = por %p175, %p176
      %p178 = scmp.ne.s32.totalorder %s164, %s165
      %p179 = scmp.eq.s32.totalorder %s26, 1
      %p180 = por %p178, %p179
      %p182 = scmp.ne.s32.totalorder %s165, %s181
      %p183 = scmp.eq.s32.totalorder %s26, 0
      %p184 = por %p182, %p183
      %p185 = scmp.le.s32.totalorder 1, %s20
      %p186 = scmp.lt.s32.totalorder %s20, 3
      %p187 = pnand %p185, %p186
      %p188 = pneg %p187
      // Predicated region
      $region9: #{tpu_custom_call.1} parent=5 // pred_check
        _
      $region10: #{tpu_custom_call.1} parent=5 // pred_check_branch
        %190 = sbr.rel (%p187) target = $region12
      $region11: #{tpu_custom_call.1} parent=5 // pred_region
        %s191 = ssub.s32 %s20, 1
        // Predicated region
        $region13: #{tpu_custom_call.1} parent=11 // pred_check
          %p192 = pneg %p41
        $region14: #{tpu_custom_call.1} parent=11 // pred_check_branch
          %194 = sbr.rel (%p192) target = $region16
        $region15: #{tpu_custom_call.1} parent=11 // pred_region
          %196 = vsyncadd [#allocation4], 0
          %s198 = sshll.u32 %s0, 4
          %s199 = int_to_ptr.hbm [resolvable:$true] %s198
          %s200 = sshll.u32 [#allocation3], 4
          %s201 = int_to_ptr.vmem [resolvable:$true] %s200
          %203 = dma.hbm_to_vmem [thread:$0]  %s199, 64, %s201, [#allocation4]
        $region16: #{tpu_custom_call.1} parent=11 // pred_fallthru
          _
        // Predicated region
        $region17: #{tpu_custom_call.1} parent=11 // pred_check
          %p204 = pneg %p88
        $region18: #{tpu_custom_call.1} parent=11 // pred_check_branch
          %206 = sbr.rel (%p204) target = $region20
        $region19: #{tpu_custom_call.1} parent=11 // pred_region
          %208 = vsyncadd [#allocation7], 0
          %s209 = sshll.u32 %s2, 4
          %s210 = int_to_ptr.hbm [resolvable:$true] %s209
          %s211 = sshll.u32 [#allocation8], 4
          %s212 = int_to_ptr.vmem [resolvable:$true] %s211
          %217 = dma.hbm_to_vmem [thread:$0]  %s210, 1024, %s212, [#allocation7], 64, 64, 4
        $region20: #{tpu_custom_call.1} parent=11 // pred_fallthru
          _
        // Predicated region
        $region21: #{tpu_custom_call.1} parent=11 // pred_check
          %p218 = pneg %p109
        $region22: #{tpu_custom_call.1} parent=11 // pred_check_branch
          %220 = sbr.rel (%p218) target = $region24
        $region23: #{tpu_custom_call.1} parent=11 // pred_region
          _
        $region24: #{tpu_custom_call.1} parent=11 // pred_fallthru
          _
        // Predicated region
        $region25: #{tpu_custom_call.1} parent=11 // pred_check
          %p221 = pneg %p130
        $region26: #{tpu_custom_call.1} parent=11 // pred_check_branch
          %223 = sbr.rel (%p221) target = $region28
        $region27: #{tpu_custom_call.1} parent=11 // pred_region
          %225 = vsyncadd [#allocation10], 0
          %s226 = sshll.u32 %s4, 4
          %s227 = int_to_ptr.hbm [resolvable:$true] %s226
          %s228 = sshll.u32 [#allocation9], 4
          %s229 = int_to_ptr.vmem [resolvable:$true] %s228
          %234 = dma.hbm_to_vmem [thread:$0]  %s227, 1024, %s229, [#allocation10], 64, 64, 4
        $region28: #{tpu_custom_call.1} parent=11 // pred_fallthru
          _
        // Predicated region
        $region29: #{tpu_custom_call.1} parent=11 // pred_check
          %p235 = pneg %p151
        $region30: #{tpu_custom_call.1} parent=11 // pred_check_branch
          %237 = sbr.rel (%p235) target = $region32
        $region31: #{tpu_custom_call.1} parent=11 // pred_region
          _
        $region32: #{tpu_custom_call.1} parent=11 // pred_fallthru
          _
      $region12: #{tpu_custom_call.1} parent=5 // pred_fallthru
        _
      %p238 = scmp.lt.s32.totalorder %s20, 2
      // Predicated region
      $region33: #{tpu_custom_call.1} parent=5 // pred_check
        %p239 = pneg %p238
      $region34: #{tpu_custom_call.1} parent=5 // pred_check_branch
        %241 = sbr.rel (%p239) target = $region36
      $region35: #{tpu_custom_call.1} parent=5 // pred_region
        // Predicated region
        $region37: #{tpu_custom_call.1} parent=35 // pred_check
          %p242 = pneg %p61
        $region38: #{tpu_custom_call.1} parent=35 // pred_check_branch
          %244 = sbr.rel (%p242) target = $region40
        $region39: #{tpu_custom_call.1} parent=35 // pred_region
          %s245 = sand.u32 %s20, 1
          %s246 = scalar_lea.sflag [#allocation7], %s245
          %s247 = sand.u32 %s51, 1
          %s248 = smul.addr %s247, 16
          %s249 = scalar_lea.vmem [#allocation6], %s248
          %251 = vsyncadd %s246, 0
          %s252 = smul.addr %s20, 2
          %s253 = smul.addr %s252, 8
          %s254 = scalar_lea.hbm %s1, %s253
          %s255 = sshll.u32 %s254, 4
          %s256 = int_to_ptr.hbm [resolvable:$true] %s255
          %s257 = sshll.u32 %s249, 4
          %s258 = int_to_ptr.vmem [resolvable:$true] %s257
          %263 = dma.hbm_to_vmem [thread:$0]  %s256, 256, %s258, %s246, 128, 128, 8
        $region40: #{tpu_custom_call.1} parent=35 // pred_fallthru
          _
      $region36: #{tpu_custom_call.1} parent=5 // pred_fallthru
        _
      %p264 = scmp.le.s32.totalorder 1, %s20
      %p265 = scmp.lt.s32.totalorder %s20, 3
      %p266 = pnand %p264, %p265
      %p267 = pneg %p266
      // Predicated region
      $region41: #{tpu_custom_call.1} parent=5 // pred_check
        _
      $region42: #{tpu_custom_call.1} parent=5 // pred_check_branch
        %269 = sbr.rel (%p266) target = $region44
      $region43: #{tpu_custom_call.1} parent=5 // pred_region
        %s270 = ssub.s32 %s20, 1
        // Predicated region
        $region45: #{tpu_custom_call.1} parent=43 // pred_check
          %p271 = pneg %p41
        $region46: #{tpu_custom_call.1} parent=43 // pred_check_branch
          %273 = sbr.rel (%p271) target = $region48
        $region47: #{tpu_custom_call.1} parent=43 // pred_region
          %275 = dma.done [#allocation4], 64
        $region48: #{tpu_custom_call.1} parent=43 // pred_fallthru
          _
        %s276 = sand.u32 %s25, 1
        %s277 = scalar_lea.sflag [#allocation7], %s276
        %s278 = sand.u32 %s54, 1
        %s279 = smul.addr %s278, 16
        %s280 = scalar_lea.vmem [#allocation6], %s279
        // Predicated region
        $region49: #{tpu_custom_call.1} parent=43 // pred_check
          %p281 = pneg %p67
        $region50: #{tpu_custom_call.1} parent=43 // pred_check_branch
          %283 = sbr.rel (%p281) target = $region52
        $region51: #{tpu_custom_call.1} parent=43 // pred_region
          %285 = dma.done %s277, 256
        $region52: #{tpu_custom_call.1} parent=43 // pred_fallthru
          _
        // Predicated region
        $region53: #{tpu_custom_call.1} parent=43 // pred_check
          %p286 = pneg %p88
        $region54: #{tpu_custom_call.1} parent=43 // pred_check_branch
          %288 = sbr.rel (%p286) target = $region56
        $region55: #{tpu_custom_call.1} parent=43 // pred_region
          %290 = dma.done [#allocation7], 1024
        $region56: #{tpu_custom_call.1} parent=43 // pred_fallthru
          _
        // Predicated region
        $region57: #{tpu_custom_call.1} parent=43 // pred_check
          %p291 = pneg %p130
        $region58: #{tpu_custom_call.1} parent=43 // pred_check_branch
          %293 = sbr.rel (%p291) target = $region60
        $region59: #{tpu_custom_call.1} parent=43 // pred_region
          %295 = dma.done [#allocation10], 1024
        $region60: #{tpu_custom_call.1} parent=43 // pred_fallthru
          _
        %p296 = pneg %p41
        %p297 = pneg %p38
        %s298 = sand.u32 %s25, 1
        %s299 = scalar_lea.sflag [#allocation7], %s298
        %s300 = sand.u32 %s54, 1
        %s301 = smul.addr %s300, 16
        %s302 = scalar_lea.vmem [#allocation6], %s301
        %p303 = pneg %p67
        %p304 = pneg %p64
        %p305 = pneg %p88
        %p306 = pneg %p85
        %p307 = pneg %p109
        %p308 = pneg %p106
        %p309 = pneg %p130
        %p310 = pneg %p127
        %p311 = pneg %p151
        %p312 = pneg %p148
        %p313 = pneg %p177
        %p314 = pneg %p174
        %s315 = sand.u32 %s164, 1
        %s316 = scalar_lea.sflag [#allocation5], %s315
        %s317 = sand.u32 %s164, 1
        %s318 = smul.addr %s317, 8
        %s319 = scalar_lea.vmem [#allocation11], %s318
        %v321 = vld [vmem:[#allocation3] sm:$0xf]
        %v322 = vld [vmem:[%s280] sm:$0xff]
        %v323 = vld [vmem:[%s280 + $0x8] sm:$0xff]
        %v324 = vpack.c.bf16 %v323, %v322
        %vm325 = vcmask 130048
        %v327 = vsel %vm325, %v321, 0
        %329 = vmatpush.bf16.msra.mxu0 0
        %330 = vmatpush.bf16.msra.mxu0 0
        %331 = vmatpush.bf16.msra.mxu0 0
        %332 = vmatpush.bf16.msra.mxu0 0
        %333 = vmatpush.bf16.msra.mxu0 0
        %334 = vmatpush.bf16.msra.mxu0 0
        %335 = vmatpush.bf16.msra.mxu0 0
        %336 = vmatpush.bf16.msra.mxu0 %v324
        %337 = vmatmul.bf16.gmra.mxu0 %v327
        %v338 = vpop.f32.mrf.mxu0
        %v339 = vadd.f32 0.0, %v338
        %v340 = vpop.f32.mrf.mxu0
        %341 = vdwg.mxu0
        %342 = vst [vmem:[#allocation2] sm:$0xff] %v339
        %v343 = vld [vmem:[#allocation2] sm:$0xff]
        %v344 = vpack.c.bf16 %v343, %v343
        %v345 = vld [vmem:[#allocation8] sm:$0xf]
        %v346 = vld [vmem:[#allocation8 + $0x4] sm:$0xf]
        %v347 = vld [vmem:[#allocation8 + $0x8] sm:$0xf]
        %v348 = vld [vmem:[#allocation8 + $0xc] sm:$0xf]
        %v349 = vld [vmem:[#allocation8 + $0x10] sm:$0xf]
        %v350 = vld [vmem:[#allocation8 + $0x14] sm:$0xf]
        %v351 = vld [vmem:[#allocation8 + $0x18] sm:$0xf]
        %v352 = vld [vmem:[#allocation8 + $0x1c] sm:$0xf]
        %v353 = vld [vmem:[#allocation8 + $0x20] sm:$0xf]
        %v354 = vld [vmem:[#allocation8 + $0x24] sm:$0xf]
        %v355 = vld [vmem:[#allocation8 + $0x28] sm:$0xf]
        %v356 = vld [vmem:[#allocation8 + $0x2c] sm:$0xf]
        %v357 = vld [vmem:[#allocation8 + $0x30] sm:$0xf]
        %v358 = vld [vmem:[#allocation8 + $0x34] sm:$0xf]
        %v359 = vld [vmem:[#allocation8 + $0x38] sm:$0xf]
        %v360 = vld [vmem:[#allocation8 + $0x3c] sm:$0xf]
        %v361 = vld [vmem:[%s3] sm:$0x1]
        %v363 = vperm.slane %v361, 0
        %v381 = vunpack.c.l.b16 %v345
        %v382 = vunpack.c.l.b16 %v346
        %v383 = vunpack.c.l.b16 %v347
        %v384 = vunpack.c.l.b16 %v348
        %v385 = vunpack.c.l.b16 %v349
        %v386 = vunpack.c.l.b16 %v350
        %v387 = vunpack.c.l.b16 %v351
        %v388 = vunpack.c.l.b16 %v352
        %v389 = vunpack.c.l.b16 %v353
        %v390 = vunpack.c.l.b16 %v354
        %v391 = vunpack.c.l.b16 %v355
        %v392 = vunpack.c.l.b16 %v356
        %v393 = vunpack.c.l.b16 %v357
        %v394 = vunpack.c.l.b16 %v358
        %v395 = vunpack.c.l.b16 %v359
        %v396 = vunpack.c.l.b16 %v360
        %v397 = vpack.c.b16 %v382, %v381
        %v398 = vpack.c.b16 %v384, %v383
        %v399 = vpack.c.b16 %v386, %v385
        %v400 = vpack.c.b16 %v388, %v387
        %v401 = vpack.c.b16 %v390, %v389
        %v402 = vpack.c.b16 %v392, %v391
        %v403 = vpack.c.b16 %v394, %v393
        %v404 = vpack.c.b16 %v396, %v395
        %413 = vmatpush.bf16.msra.mxu0 %v404
        %414 = vmatpush.bf16.msra.mxu0 %v403
        %415 = vmatpush.bf16.msra.mxu0 %v402
        %416 = vmatpush.bf16.msra.mxu0 %v401
        %417 = vmatpush.bf16.msra.mxu0 %v400
        %418 = vmatpush.bf16.msra.mxu0 %v399
        %419 = vmatpush.bf16.msra.mxu0 %v398
        %420 = vmatpush.bf16.msra.mxu0 %v397
        %421 = vmatmul.bf16.gmra.mxu0 %v344
        %v422 = vpop.f32.mrf.mxu0
        %v423 = vadd.f32 %v363, %v422
        %v424 = vpop.f32.mrf.mxu0
        %425 = vdwg.mxu0
        %v426 = vmin.f32 %v423, 20.0
        %v427 = vmul.f32 %v426, 1.442695
        %v428 = vpow.pop %v427
        %v429 = vadd.f32 %v428, 2.0
        %v430 = vmul.f32 %v428, %v429
        %vm431 = vcmp.gt.f32.partialorder %v423, 20.0
        %v432 = vmul.f32 %v423, %v430
        %v433 = vadd.f32 %v430, 2.0
        %v434 = vrcp.pop %v433
        %v435 = vmul.f32 %v433, %v434
        %v436 = vsub.f32 1.0, %v435
        %v437 = vmul.f32 %v434, %v436
        %v438 = vadd.f32 %v434, %v437
        %vm439 = vweird.f32 %v433
        %vm440 = vweird.f32 %v434
        %vm441 = vmor %vm439, %vm440
        %v442 = vsel %vm441, %v434, %v438
        %v443 = vand.u32 2147483647, %v433
        %vm444 = vcmp.eq.f32.partialorder %v443, 8.507059e+37
        %v445 = vand.u32 %v433, 2147483648
        %v446 = vor.u32 1.1754944e-38, %v445
        %v447 = vsel %vm444, %v446, %v442
        %v448 = vmul.f32 %v432, %v447
        %v449 = vsel %vm431, %v423, %v448
        %v450 = vpack.c.bf16 %v449, %v449
        %v451 = vld [vmem:[#allocation9] sm:$0xf]
        %v452 = vld [vmem:[#allocation9 + $0x4] sm:$0xf]
        %v453 = vld [vmem:[#allocation9 + $0x8] sm:$0xf]
        %v454 = vld [vmem:[#allocation9 + $0xc] sm:$0xf]
        %v455 = vld [vmem:[#allocation9 + $0x10] sm:$0xf]
        %v456 = vld [vmem:[#allocation9 + $0x14] sm:$0xf]
        %v457 = vld [vmem:[#allocation9 + $0x18] sm:$0xf]
        %v458 = vld [vmem:[#allocation9 + $0x1c] sm:$0xf]
        %v459 = vld [vmem:[#allocation9 + $0x20] sm:$0xf]
        %v460 = vld [vmem:[#allocation9 + $0x24] sm:$0xf]
        %v461 = vld [vmem:[#allocation9 + $0x28] sm:$0xf]
        %v462 = vld [vmem:[#allocation9 + $0x2c] sm:$0xf]
        %v463 = vld [vmem:[#allocation9 + $0x30] sm:$0xf]
        %v464 = vld [vmem:[#allocation9 + $0x34] sm:$0xf]
        %v465 = vld [vmem:[#allocation9 + $0x38] sm:$0xf]
        %v466 = vld [vmem:[#allocation9 + $0x3c] sm:$0xf]
        %v467 = vld [vmem:[%s5] sm:$0x1]
        %v469 = vperm.slane %v467, 0
        %v487 = vunpack.c.l.b16 %v451
        %v488 = vunpack.c.l.b16 %v452
        %v489 = vunpack.c.l.b16 %v453
        %v490 = vunpack.c.l.b16 %v454
        %v491 = vunpack.c.l.b16 %v455
        %v492 = vunpack.c.l.b16 %v456
        %v493 = vunpack.c.l.b16 %v457
        %v494 = vunpack.c.l.b16 %v458
        %v495 = vunpack.c.l.b16 %v459
        %v496 = vunpack.c.l.b16 %v460
        %v497 = vunpack.c.l.b16 %v461
        %v498 = vunpack.c.l.b16 %v462
        %v499 = vunpack.c.l.b16 %v463
        %v500 = vunpack.c.l.b16 %v464
        %v501 = vunpack.c.l.b16 %v465
        %v502 = vunpack.c.l.b16 %v466
        %v503 = vpack.c.b16 %v488, %v487
        %v504 = vpack.c.b16 %v490, %v489
        %v505 = vpack.c.b16 %v492, %v491
        %v506 = vpack.c.b16 %v494, %v493
        %v507 = vpack.c.b16 %v496, %v495
        %v508 = vpack.c.b16 %v498, %v497
        %v509 = vpack.c.b16 %v500, %v499
        %v510 = vpack.c.b16 %v502, %v501
        %519 = vmatpush.bf16.msra.mxu0 %v510
        %520 = vmatpush.bf16.msra.mxu0 %v509
        %521 = vmatpush.bf16.msra.mxu0 %v508
        %522 = vmatpush.bf16.msra.mxu0 %v507
        %523 = vmatpush.bf16.msra.mxu0 %v506
        %524 = vmatpush.bf16.msra.mxu0 %v505
        %525 = vmatpush.bf16.msra.mxu0 %v504
        %526 = vmatpush.bf16.msra.mxu0 %v503
        %527 = vmatmul.bf16.gmra.mxu0 %v450
        %v528 = vpop.f32.mrf.mxu0
        %v529 = vadd.f32 %v469, %v528
        %v530 = vpop.f32.mrf.mxu0
        %531 = vdwg.mxu0
        %532 = vst [vmem:[%s319] sm:$0xff] %v529
        %s533 = sand.u32 %s164, 1
        %s534 = scalar_lea.sflag [#allocation5], %s533
        %s535 = sand.u32 %s164, 1
        %s536 = smul.addr %s535, 8
        %s537 = scalar_lea.vmem [#allocation11], %s536
        // Predicated region
        $region61: #{tpu_custom_call.1} parent=43 // pred_check
          %p538 = pneg %p174
        $region62: #{tpu_custom_call.1} parent=43 // pred_check_branch
          %540 = sbr.rel (%p538) target = $region64
        $region63: #{tpu_custom_call.1} parent=43 // pred_region
          %542 = vsyncadd %s534, 0
          %s543 = smul.addr %s25, 8
          %s544 = scalar_lea.hbm %s6, %s543
          %s546 = sshll.u32 %s537, 4
          %s547 = int_to_ptr.vmem [resolvable:$true] %s546
          %s548 = sshll.u32 %s544, 4
          %s549 = int_to_ptr.hbm [resolvable:$true] %s548
          %551 = dma.vmem_to_hbm [thread:$0]  %s547, 128, %s549, %s534
        $region64: #{tpu_custom_call.1} parent=43 // pred_fallthru
          _
      $region44: #{tpu_custom_call.1} parent=5 // pred_fallthru
        _
      %p552 = scmp.le.s32.totalorder 2, %s20
      // Predicated region
      $region65: #{tpu_custom_call.1} parent=5 // pred_check
        %p553 = pneg %p552
      $region66: #{tpu_custom_call.1} parent=5 // pred_check_branch
        %555 = sbr.rel (%p553) target = $region68
      $region67: #{tpu_custom_call.1} parent=5 // pred_region
        %s556 = ssub.s32 %s20, 2
        // Predicated region
        $region69: #{tpu_custom_call.1} parent=67 // pred_check
          %p557 = pneg %p180
        $region70: #{tpu_custom_call.1} parent=67 // pred_check_branch
          %559 = sbr.rel (%p557) target = $region72
        $region71: #{tpu_custom_call.1} parent=67 // pred_region
          %s560 = sand.u32 %s165, 1
          %s561 = scalar_lea.sflag [#allocation5], %s560
          %s562 = sand.u32 %s165, 1
          %s563 = smul.addr %s562, 8
          %s564 = scalar_lea.vmem [#allocation11], %s563
          %566 = dma.done %s561, 128
        $region72: #{tpu_custom_call.1} parent=67 // pred_fallthru
          _
      $region68: #{tpu_custom_call.1} parent=5 // pred_fallthru
        _
    $region6: #{tpu_custom_call.1} parent=1 // loop_footer
      %s24 = sadd.s32 1, %s20
    $region7: #{tpu_custom_call.1} parent=1 // loop_footer_branch
      %19 = sbr.rel target = $region3
    $region8: #{tpu_custom_call.1} parent=1 // loop_exit
      _
    %567 = vsyncpa [#allocation4], 1
    %s568 = scalar_lea.sflag [#allocation4], 1
    %569 = vsyncpa %s568, 1
    %570 = vsyncpa [#allocation7], 1
    %s571 = scalar_lea.sflag [#allocation7], 1
    %572 = vsyncpa %s571, 1
    %573 = vsyncpa [#allocation10], 1
    %574 = vsyncpa [#allocation5], 1
    %s575 = scalar_lea.sflag [#allocation5], 1
    %576 = vsyncpa %s575, 1

</llo_original>
